<compile_context>
chip_gen: v7x
topology: tpu7x:2x2x1
jax: 0.10.0
libtpu: 0.0.40
codegen_flags: <defaults>
</compile_context>

<pallas_src>
import jax
import jax.numpy as jnp
from jax.experimental import pallas as pl
from jax.experimental.pallas import tpu as pltpu

_LANE_CHOICES = (512, 256, 128)  # lane-dense last-dim candidates (128-multiples)
_MAX_TILE_ROWS = 1024            # 1024 x 512 x 4B = 2 MiB per buffer


def _copy_kernel(x_ref, o_ref):
    # Pure pass-through on the current VMEM tile.
    o_ref[...] = x_ref[...]


def _mlie_forward_impl(x):
    orig_shape = x.shape
    total = x.size

    flat = x.reshape(-1)

    # Pick the widest lane count that divides the flattened size so no padding
    # (and therefore no extra full-array copy) is needed in the common case.
    lanes = None
    for cand in _LANE_CHOICES:
        if total % cand == 0 and total >= cand:
            lanes = cand
            break
    if lanes is None:
        # Rare fallback: pad up to one 512-wide row boundary (single copy).
        lanes = _LANE_CHOICES[0]
        padded = pl.cdiv(total, lanes) * lanes
        flat = jnp.pad(flat, (0, padded - total))

    rows = flat.size // lanes
    x2d = flat.reshape(rows, lanes)

    if rows <= _MAX_TILE_ROWS:
        # Single block: block row dim equals the full array dim, so the
        # (8,128) divisibility rule's full-dim exception applies.
        tile_rows = rows
        grid = (1,)
    else:
        # Partial last block (if any) is handled by Pallas via masked
        # out-of-bounds reads/writes, so no padding to a tile multiple.
        tile_rows = _MAX_TILE_ROWS
        grid = (pl.cdiv(rows, tile_rows),)

    out2d = pl.pallas_call(
        _copy_kernel,
        out_shape=jax.ShapeDtypeStruct((rows, lanes), x.dtype),
        grid=grid,
        in_specs=[pl.BlockSpec((tile_rows, lanes), lambda i: (i, 0))],
        out_specs=pl.BlockSpec((tile_rows, lanes), lambda i: (i, 0)),
        input_output_aliases={0: 0},
        compiler_params=pltpu.CompilerParams(
            dimension_semantics=("parallel",),
        ),
    )(x2d)

    out_flat = out2d.reshape(-1)
    if out_flat.size != total:
        out_flat = out_flat[:total]
    return out_flat.reshape(orig_shape)


# Shapes are static under jit, so lane/tile selection above is trace-time only.
mlie_forward = jax.jit(_mlie_forward_impl)


if __name__ == "__main__":
    key = jax.random.PRNGKey(0)
    # Small NCHW input consistent with a conv-style module: batch=2,
    # channels=4, spatial=16x16.
    x = jax.random.normal(key, (2, 4, 16, 16), dtype=jnp.float32)

    y = mlie_forward(x)
    y = jax.block_until_ready(y)

    # Sanity check against the (identity) reference semantics.
    assert y.shape == x.shape and y.dtype == x.dtype
    assert bool(jnp.allclose(y, x))

    print("KERNEL_OK")
</pallas_src>

<mosaic_0001>
module attributes {stable_mosaic.version = 11 : i64} {
  func.func @_copy_kernel(%arg0: i32, %arg1: memref<4x512xf32, #tpu.memory_space<vmem>>, %arg2: memref<4x512xf32, #tpu.memory_space<vmem>>) attributes {dimension_semantics = [#tpu.dimension_semantics<parallel>], iteration_bounds = array<i64: 1>, scalar_prefetch = 0 : i64, scratch_operands = 0 : i64, tpu.core_type = #tpu.core_type<tc>, window_params = [{transform_indices = @transform_0, window_bounds = array<i64: 4, 512>}, {transform_indices = @transform_1, window_bounds = array<i64: 4, 512>}]} {
    %c0 = arith.constant 0 : index
    %c0_0 = arith.constant 0 : index
    %0 = vector.load %arg1[%c0, %c0_0] : memref<4x512xf32, #tpu.memory_space<vmem>>, vector<4x512xf32>
    %c0_1 = arith.constant 0 : index
    %c0_2 = arith.constant 0 : index
    %1 = vector.load %arg2[%c0_1, %c0_2] : memref<4x512xf32, #tpu.memory_space<vmem>>, vector<4x512xf32>
    tpu.vector_store %arg2[%c0_1, %c0_2], %0 {strides = array<i32>} : memref<4x512xf32, #tpu.memory_space<vmem>>, vector<4x512xf32>,
    return
  }
  func.func @transform_0(%arg0: i32) -> (i32, i32) {
    %c0_i32 = arith.constant 0 : i32
    %c0_i32_0 = arith.constant 0 : i32
    return %arg0, %c0_i32 : i32, i32
  }
  func.func @transform_1(%arg0: i32) -> (i32, i32) {
    %c0_i32 = arith.constant 0 : i32
    %c0_i32_0 = arith.constant 0 : i32
    return %arg0, %c0_i32 : i32, i32
  }
}

</mosaic_0001>

<llo_original>
// kernel: _mlie_forward_impl.1
$region0: #{_mlie_forward_impl.1}
  #allocation0 [shape = 'u32[]', space=smem, size = 0x4, offset = 0x4, fixed_abs, tag = 'smem constant byte address 0x4 - core index']
  #allocation1 [shape = 'u32[144,128]{1,0:T(1,128)}', space=vmem, size = 0x12000, scoped, tag = 'internal scratch']
  %s0 = inlined_call_operand.vmem [shape: f32[4,512], index: 0, kind: input, shape index: {}, may-alias: {0,1}]
  %s1 = inlined_call_operand.vmem [shape: f32[4,512], index: 1, kind: output, shape index: {}, may-alias: {0,1}]
  %s2 = sld [smem:[#allocation0]]
  $region14: #{_mlie_forward_impl.1} parent=0
    _
  %s4 = ssub.s32 1, %s2
  %s5 = scalar_select 0, %s4, %s2
  // Predicated region
  $region2: #{_mlie_forward_impl.1} parent=0 // pred_check
    _
  $region3: #{_mlie_forward_impl.1} parent=0 // pred_check_branch
    %7 = sbr.rel (0) target = $region5
  $region4: #{_mlie_forward_impl.1} parent=0 // pred_region
    _
  $region5: #{_mlie_forward_impl.1} parent=0 // pred_fallthru
    _
  %v8 = vld [vmem:[%s0] sm:$0xff]
  %v9 = vld [vmem:[%s0 + $0x8] sm:$0xff]
  %10 = vst [vmem:[%s1] sm:$0xff] %v8
  %11 = vst [vmem:[%s1 + $0x8] sm:$0xff] %v9
  // Predicated region
  $region6: #{_mlie_forward_impl.1} parent=0 // pred_check
    _
  $region7: #{_mlie_forward_impl.1} parent=0 // pred_check_branch
    %13 = sbr.rel (0) target = $region9
  $region8: #{_mlie_forward_impl.1} parent=0 // pred_region
    _
  $region9: #{_mlie_forward_impl.1} parent=0 // pred_fallthru
    _
  // Predicated region
  $region10: #{_mlie_forward_impl.1} parent=0 // pred_check
    _
  $region11: #{_mlie_forward_impl.1} parent=0 // pred_check_branch
    %15 = sbr.rel (0) target = $region13
  $region12: #{_mlie_forward_impl.1} parent=0 // pred_region
    _
  $region13: #{_mlie_forward_impl.1} parent=0 // pred_fallthru
    _

</llo_original>
